<compile_context>
chip_gen: v6e
topology: v6e:2x2x1
jax: 0.10.0
libtpu: 0.0.40
codegen_flags: <defaults>
</compile_context>

<pallas_src>
import math
import functools

import jax
import jax.numpy as jnp
from jax import lax
from jax.experimental import pallas as pl
from jax.experimental.pallas import tpu as pltpu


# ---------------------------------------------------------------------------
# in-kernel math helpers (traced inside the Pallas bodies, f32)
# ---------------------------------------------------------------------------
def _layernorm(v, g, b, eps=1e-5):
    mu = jnp.mean(v, axis=-1, keepdims=True)
    var = jnp.mean(jnp.square(v - mu), axis=-1, keepdims=True)
    return (v - mu) * lax.rsqrt(var + eps) * g + b


def _gelu(x):
    # exact OpenAI / NewGELU tanh formulation
    c = math.sqrt(2.0 / math.pi)
    return 0.5 * x * (1.0 + jnp.tanh(c * (x + 0.044715 * x * jnp.square(x))))


def _bf16(x):
    return x.astype(jnp.bfloat16)


# ---------------------------------------------------------------------------
# kernel 1: LayerNorm1 + fused QKV projection (grid: batch x q-tiles)
# ---------------------------------------------------------------------------
def ln_qkv_kernel(x_ref, g1_ref, b1_ref, wqkv_ref, bqkv_ref, qkv_ref):
    x = x_ref[...]                                             # (tq, C) f32
    h = _layernorm(x, g1_ref[...], b1_ref[...])                # f32
    qkv = jnp.dot(_bf16(h), wqkv_ref[...],
                  preferred_element_type=jnp.float32) + bqkv_ref[...]
    qkv_ref[...] = _bf16(qkv)                                  # (tq, 3C) bf16


# ---------------------------------------------------------------------------
# kernel 2: flash-style causal attention (online softmax over kv tiles) fused
# with attn-proj + residual + LayerNorm2 + MLP + residual at the last kv step.
# grid: (batch, q-tiles, kv-tiles), kv axis is the (arbitrary) reduction axis.
# ---------------------------------------------------------------------------
def attn_mlp_kernel(x_ref, q_ref, k_ref, v_ref,
                    wpr_ref, bpr_ref, g2_ref, b2_ref,
                    wfc_ref, bfc_ref, wmp_ref, bmp_ref,
                    out_ref, m_scr, l_scr, acc_scr, *, n_head, scale):
    qi = pl.program_id(1)
    ki = pl.program_id(2)
    tq, C = q_ref.shape
    tk = k_ref.shape[0]
    hd = C // n_head

    @pl.when(ki == 0)
    def _init():
        m_scr[...] = jnp.full_like(m_scr, -1e30)
        l_scr[...] = jnp.zeros_like(l_scr)
        acc_scr[...] = jnp.zeros_like(acc_scr)

    q_start = qi * tq
    k_start = ki * tk

    # Skip kv tiles that are entirely in the masked (future) region.  Their
    # DMA is also skipped because the k/v index_map is clamped (see wrapper).
    @pl.when(k_start <= q_start + tq - 1)
    def _compute():
        rows = q_start + lax.broadcasted_iota(jnp.int32, (tq, tk), 0)
        cols = k_start + lax.broadcasted_iota(jnp.int32, (tq, tk), 1)
        causal = cols <= rows
        # TODO(synk): convert to lax.fori_loop + pl.ds / aligned head pairs if
        # profiles show the unrolled head loop spilling or XLU-bound relayouts.
        for h in range(n_head):                    # static loop, lane slices
            lo, hi = h * hd, (h + 1) * hd
            q_h = q_ref[:, lo:hi]                  # (tq, hd) bf16
            k_h = k_ref[:, lo:hi]                  # (tk, hd) bf16
            v_h = v_ref[:, lo:hi]                  # (tk, hd) bf16
            # q @ k^T without materializing a transpose
            s = lax.dot_general(q_h, k_h, (((1,), (1,)), ((), ())),
                                preferred_element_type=jnp.float32) * scale
            s = jnp.where(causal, s, -1e30)        # (tq, tk) f32
            m_old = m_scr[h]                       # (tq, 1)
            m_new = jnp.maximum(m_old, jnp.max(s, axis=-1, keepdims=True))
            alpha = jnp.exp(m_old - m_new)
            p = jnp.exp(s - m_new)
            l_scr[h] = alpha * l_scr[h] + jnp.sum(p, axis=-1, keepdims=True)
            acc_scr[:, lo:hi] = alpha * acc_scr[:, lo:hi] + jnp.dot(
                _bf16(p), v_h, preferred_element_type=jnp.float32)
            m_scr[h] = m_new

    @pl.when(ki == pl.num_programs(2) - 1)
    def _finalize():
        # Per-head 1/l normalization in place on the (tq, C) accumulator:
        # no n_head-way concatenate / full relayout.
        for h in range(n_head):
            lo, hi = h * hd, (h + 1) * hd
            inv_l = pl.reciprocal(l_scr[h], approx=True)       # (tq, 1)
            acc_scr[:, lo:hi] = acc_scr[:, lo:hi] * inv_l
        y = jnp.dot(_bf16(acc_scr[...]), wpr_ref[...],
                    preferred_element_type=jnp.float32) + bpr_ref[...]
        x_res = x_ref[...] + y                     # residual 1 (f32)
        h2 = _layernorm(x_res, g2_ref[...], b2_ref[...])
        f = jnp.dot(_bf16(h2), wfc_ref[...],
                    preferred_element_type=jnp.float32) + bfc_ref[...]
        f = _gelu(f)                               # (tq, 4C) tile-sized only
        f = jnp.dot(_bf16(f), wmp_ref[...],
                    preferred_element_type=jnp.float32) + bmp_ref[...]
        out_ref[...] = (x_res + f).astype(out_ref.dtype)   # residual 2


# ---------------------------------------------------------------------------
# pallas_call wrappers
# ---------------------------------------------------------------------------
def _vmem_cap_bytes():
    """Per-chip VMEM budget: leave headroom below physical capacity."""
    phys = 64 << 20
    try:
        phys = int(pltpu.get_tpu_info().vmem_capacity_bytes)
    except Exception:
        pass
    # ~56 MiB on v7x (64 MiB/TC), ~112 MiB on v5e/v6e (128 MiB).
    return max(phys - max(phys // 8, 8 << 20), 16 << 20)


def _vmem_limit_bytes(*nbytes):
    # double-buffered blocks + slack for in-kernel transients, clamped to the
    # per-chip cap.
    need = 2 * sum(int(n) for n in nbytes) + (4 << 20)
    return int(min(max(need, 16 << 20), _vmem_cap_bytes()))


def _const_spec(shape, single_buffer):
    """BlockSpec for a block whose index never changes across the grid.

    With single_buffer=True it requests pipeline_mode=pl.Buffered(1) so the
    (never-changing) weights/biases are not double-buffered in VMEM.
    """
    idx = lambda *args: (0,) * len(shape)
    if single_buffer:
        return pl.BlockSpec(shape, idx, pipeline_mode=pl.Buffered(1))
    return pl.BlockSpec(shape, idx)


def _run_ln_qkv(x, p, tq, single_buffer):
    B, T, C = x.shape
    vmem = _vmem_limit_bytes(
        tq * C * 4,             # x tile (f32)
        C * 3 * C * 2,          # w_qkv (bf16)
        (3 * C + 2 * C) * 4,    # bias + LN params
        tq * 3 * C * 2,         # qkv out tile (bf16)
    )
    return pl.pallas_call(
        ln_qkv_kernel,
        out_shape=jax.ShapeDtypeStruct((B, T, 3 * C), jnp.bfloat16),
        grid=(B, T // tq),
        in_specs=[
            pl.BlockSpec((None, tq, C), lambda b, qi: (b, qi, 0)),
            _const_spec((1, C), single_buffer),          # ln1_g
            _const_spec((1, C), single_buffer),          # ln1_b
            _const_spec((C, 3 * C), single_buffer),      # w_qkv
            _const_spec((1, 3 * C), single_buffer),      # b_qkv
        ],
        out_specs=pl.BlockSpec((None, tq, 3 * C), lambda b, qi: (b, qi, 0)),
        compiler_params=pltpu.CompilerParams(
            dimension_semantics=("parallel", "parallel"),
            vmem_limit_bytes=vmem),
    )(x, p['ln1_g'], p['ln1_b'], p['w_qkv'], p['b_qkv'])


def _run_attn_mlp(x, qkv, p, n_head, tq, tk, single_buffer):
    B, T, C = x.shape
    hd = C // n_head
    kernel = functools.partial(attn_mlp_kernel, n_head=n_head,
                               scale=1.0 / math.sqrt(hd))

    def kv_block(qi, ki):
        # Clamp to the last causally-needed kv block: fully-masked (future)
        # kv steps repeat the previous block index, so Pallas skips their DMA.
        last = ((qi + 1) * tq - 1) // tk
        return jnp.minimum(ki, last)

    vmem = _vmem_limit_bytes(
        tq * C * 4,                              # x residual tile (f32)
        (tq + 2 * tk) * C * 2,                   # q/k/v tiles (bf16)
        (C * C + 8 * C * C) * 2,                 # w_proj + w_fc + w_mp (bf16)
        (4 * C + 3 * C) * 4,                     # biases + LN2 params
        tq * C * 4,                              # out tile (f32)
        tq * (C + 2 * 128 * n_head) * 4,         # acc + m/l scratch (padded)
        tq * tk * 4 + tq * 4 * C * 4,            # per-head scores + MLP interm.
    )
    # TODO(synk): for very large C, additionally tile the 4C contraction of the
    # MLP weights over a fourth grid axis; not needed at GPT-2-small scales.
    return pl.pallas_call(
        kernel,
        out_shape=jax.ShapeDtypeStruct((B, T, C), jnp.float32),
        grid=(B, T // tq, T // tk),
        in_specs=[
            pl.BlockSpec((None, tq, C), lambda b, qi, ki: (b, qi, 0)),  # x
            pl.BlockSpec((None, tq, C), lambda b, qi, ki: (b, qi, 0)),  # q cols
            pl.BlockSpec((None, tk, C),                                  # k cols
                         lambda b, qi, ki: (b, kv_block(qi, ki), 1)),
            pl.BlockSpec((None, tk, C),                                  # v cols
                         lambda b, qi, ki: (b, kv_block(qi, ki), 2)),
            _const_spec((C, C), single_buffer),          # w_proj
            _const_spec((1, C), single_buffer),          # b_proj
            _const_spec((1, C), single_buffer),          # ln2_g
            _const_spec((1, C), single_buffer),          # ln2_b
            _const_spec((C, 4 * C), single_buffer),      # w_fc
            _const_spec((1, 4 * C), single_buffer),      # b_fc
            _const_spec((4 * C, C), single_buffer),      # w_mp
            _const_spec((1, C), single_buffer),          # b_mp
        ],
        out_specs=pl.BlockSpec((None, tq, C), lambda b, qi, ki: (b, qi, 0)),
        scratch_shapes=[
            pltpu.VMEM((n_head, tq, 1), jnp.float32),    # running max
            pltpu.VMEM((n_head, tq, 1), jnp.float32),    # running denom
            pltpu.VMEM((tq, C), jnp.float32),            # output accumulator
        ],
        compiler_params=pltpu.CompilerParams(
            dimension_semantics=("parallel", "parallel", "arbitrary"),
            vmem_limit_bytes=vmem),
    )(x, qkv, qkv, qkv,
      p['w_proj'], p['b_proj'], p['ln2_g'], p['ln2_b'],
      p['w_fc'], p['b_fc'], p['w_mp'], p['b_mp'])


def _default_tile(T):
    # Lane-dense score tiles (multiple of 128) that divide T; 256 matches the
    # v6e/v7x 256-wide MXU.  v5e users may prefer 128 via q_tile/kv_tile.
    for t in (256, 128):
        if T % t == 0:
            return t
    return T


def block_forward(x, p, *, n_head, q_tile=None, kv_tile=None,
                  single_buffer_weights=True):
    """Pallas forward of one GPT-2 Block: x + attn(ln1(x)), then + mlp(ln2(.))."""
    B, T, C = x.shape
    assert C % n_head == 0
    tq = _default_tile(T) if q_tile is None else q_tile
    tk = _default_tile(T) if kv_tile is None else kv_tile
    assert T % tq == 0 and T % tk == 0
    assert tk % 128 == 0 or tk == T, "kv tile must be a multiple of 128 (or T)"
    assert tq % 16 == 0 or tq == T, "q tile must be a multiple of 16 (or T)"
    # TODO(synk): optionally run the residual stream in bf16 end-to-end if the
    # surrounding model tolerates it (halves activation HBM traffic).

    def run(single_buffer):
        qkv = _run_ln_qkv(x, p, tq, single_buffer)              # (B, T, 3C) bf16
        return _run_attn_mlp(x, qkv, p, n_head, tq, tk, single_buffer)

    if single_buffer_weights:
        try:
            return jax.block_until_ready(run(True))
        except Exception:
            # pipeline_mode=pl.Buffered(1) not supported on this jax version:
            # fall back to the (known-good) double-buffered weight specs.
            pass
    return run(False)


# ---------------------------------------------------------------------------
# pure-JAX f32 reference (correctness check only)
# ---------------------------------------------------------------------------
def block_reference(x, p, n_head):
    B, T, C = x.shape
    hd = C // n_head
    hp = lax.Precision.HIGHEST
    f32 = lambda a: a.astype(jnp.float32)
    h = _layernorm(x, p['ln1_g'], p['ln1_b'])
    qkv = jnp.dot(h, f32(p['w_qkv']), precision=hp) + p['b_qkv']
    q, k, v = jnp.split(qkv, 3, axis=-1)
    q = q.reshape(B, T, n_head, hd).transpose(0, 2, 1, 3)
    k = k.reshape(B, T, n_head, hd).transpose(0, 2, 1, 3)
    v = v.reshape(B, T, n_head, hd).transpose(0, 2, 1, 3)
    att = jnp.einsum('bhtd,bhsd->bhts', q, k, precision=hp) / math.sqrt(hd)
    mask = jnp.tril(jnp.ones((T, T), dtype=bool))
    att = jnp.where(mask[None, None], att, -jnp.inf)
    att = jax.nn.softmax(att, axis=-1)
    y = jnp.einsum('bhts,bhsd->bhtd', att, v, precision=hp)
    y = y.transpose(0, 2, 1, 3).reshape(B, T, C)
    x = x + jnp.dot(y, f32(p['w_proj']), precision=hp) + p['b_proj']
    h2 = _layernorm(x, p['ln2_g'], p['ln2_b'])
    f = _gelu(jnp.dot(h2, f32(p['w_fc']), precision=hp) + p['b_fc'])
    return x + jnp.dot(f, f32(p['w_mp']), precision=hp) + p['b_mp']


# ---------------------------------------------------------------------------
# deterministic parameter init (matmul weights stored in bf16)
# ---------------------------------------------------------------------------
def init_block_params(key, C):
    ks = jax.random.split(key, 4)
    nrm = lambda k, shp: 0.02 * jax.random.normal(k, shp, dtype=jnp.float32)
    return {
        'ln1_g': jnp.ones((1, C), jnp.float32),
        'ln1_b': jnp.zeros((1, C), jnp.float32),
        'w_qkv': nrm(ks[0], (C, 3 * C)).astype(jnp.bfloat16),
        'b_qkv': jnp.zeros((1, 3 * C), jnp.float32),
        'w_proj': nrm(ks[1], (C, C)).astype(jnp.bfloat16),
        'b_proj': jnp.zeros((1, C), jnp.float32),
        'ln2_g': jnp.ones((1, C), jnp.float32),
        'ln2_b': jnp.zeros((1, C), jnp.float32),
        'w_fc': nrm(ks[2], (C, 4 * C)).astype(jnp.bfloat16),
        'b_fc': jnp.zeros((1, 4 * C), jnp.float32),
        'w_mp': nrm(ks[3], (4 * C, C)).astype(jnp.bfloat16),
        'b_mp': jnp.zeros((1, C), jnp.float32),
    }


if __name__ == "__main__":
    key = jax.random.PRNGKey(0)
    k_x, k_p, k_x2, k_p2 = jax.random.split(key, 4)

    # 1) small smoke test (single tile per axis)
    B, T, C, n_head = 2, 8, 32, 4
    x = jax.random.normal(k_x, (B, T, C), dtype=jnp.float32)
    params = init_block_params(k_p, C)
    out = jax.block_until_ready(block_forward(x, params, n_head=n_head))
    assert out.shape == (B, T, C)
    ref = block_reference(x, params, n_head)
    max_diff = float(jnp.max(jnp.abs(out - ref)))
    assert jnp.allclose(out, ref, atol=2e-2, rtol=2e-2), f"max diff {max_diff}"

    # 2) multi-tile test exercising the pipelined grid + causal kv-DMA clamp
    B2, T2, C2, n_head2 = 1, 256, 128, 4
    x2 = jax.random.normal(k_x2, (B2, T2, C2), dtype=jnp.float32)
    params2 = init_block_params(k_p2, C2)
    out2 = jax.block_until_ready(
        block_forward(x2, params2, n_head=n_head2, q_tile=128, kv_tile=128))
    ref2 = block_reference(x2, params2, n_head2)
    max_diff2 = float(jnp.max(jnp.abs(out2 - ref2)))
    assert jnp.allclose(out2, ref2, atol=2e-2, rtol=2e-2), f"max diff {max_diff2}"

    print("KERNEL_OK")
</pallas_src>

<mosaic_0001>
module attributes {stable_mosaic.version = 11 : i64} {
  func.func @ln_qkv_kernel(%arg0: i32, %arg1: i32, %arg2: memref<1x8x32xf32, #tpu.memory_space<vmem>>, %arg3: memref<1x32xf32, #tpu.memory_space<vmem>>, %arg4: memref<1x32xf32, #tpu.memory_space<vmem>>, %arg5: memref<32x96xbf16, #tpu.memory_space<vmem>>, %arg6: memref<1x96xf32, #tpu.memory_space<vmem>>, %arg7: memref<1x8x96xbf16, #tpu.memory_space<vmem>>) attributes {dimension_semantics = [#tpu.dimension_semantics<parallel>, #tpu.dimension_semantics<parallel>], iteration_bounds = array<i64: 2, 1>, scalar_prefetch = 0 : i64, scratch_operands = 0 : i64, tpu.core_type = #tpu.core_type<tc>, window_params = [{transform_indices = @transform_0, window_bounds = array<i64: 1, 8, 32>}, {pipeline_mode = #tpu.pipeline_mode<synchronous>, transform_indices = @transform_1, window_bounds = array<i64: 1, 32>}, {pipeline_mode = #tpu.pipeline_mode<synchronous>, transform_indices = @transform_2, window_bounds = array<i64: 1, 32>}, {pipeline_mode = #tpu.pipeline_mode<synchronous>, transform_indices = @transform_3, window_bounds = array<i64: 32, 96>}, {pipeline_mode = #tpu.pipeline_mode<synchronous>, transform_indices = @transform_4, window_bounds = array<i64: 1, 96>}, {transform_indices = @transform_5, window_bounds = array<i64: 1, 8, 96>}]} {
    %c0 = arith.constant 0 : index
    %c0_0 = arith.constant 0 : index
    %c0_1 = arith.constant 0 : index
    %0 = vector.load %arg2[%c0, %c0_0, %c0_1] : memref<1x8x32xf32, #tpu.memory_space<vmem>>, vector<1x8x32xf32>
    %1 = vector.shape_cast %0 : vector<1x8x32xf32> to vector<8x32xf32>
    %c0_2 = arith.constant 0 : index
    %c0_3 = arith.constant 0 : index
    %2 = vector.load %arg3[%c0_2, %c0_3] : memref<1x32xf32, #tpu.memory_space<vmem>>, vector<1x32xf32>
    %c0_4 = arith.constant 0 : index
    %c0_5 = arith.constant 0 : index
    %3 = vector.load %arg4[%c0_4, %c0_5] : memref<1x32xf32, #tpu.memory_space<vmem>>, vector<1x32xf32>
    %cst = arith.constant dense<0.000000e+00> : vector<8xf32>
    %4 = vector.multi_reduction <add>, %1, %cst [1] : vector<8x32xf32> to vector<8xf32>
    %5 = vector.shape_cast %4 : vector<8xf32> to vector<8x1xf32>
    %cst_6 = arith.constant 3.200000e+01 : f32
    %6 = vector.broadcast %cst_6 : f32 to vector<8x1xf32>
    %7 = arith.divf %5, %6 : vector<8x1xf32>
    %8 = vector.broadcast %7 : vector<8x1xf32> to vector<8x32xf32>
    %9 = arith.subf %1, %8 : vector<8x32xf32>
    %10 = arith.mulf %9, %9 : vector<8x32xf32>
    %cst_7 = arith.constant dense<0.000000e+00> : vector<8xf32>
    %11 = vector.multi_reduction <add>, %10, %cst_7 [1] : vector<8x32xf32> to vector<8xf32>
    %12 = vector.shape_cast %11 : vector<8xf32> to vector<8x1xf32>
    %cst_8 = arith.constant 3.200000e+01 : f32
    %13 = vector.broadcast %cst_8 : f32 to vector<8x1xf32>
    %14 = arith.divf %12, %13 : vector<8x1xf32>
    %15 = vector.broadcast %7 : vector<8x1xf32> to vector<8x32xf32>
    %16 = arith.subf %1, %15 : vector<8x32xf32>
    %cst_9 = arith.constant 9.99999974E-6 : f32
    %17 = vector.broadcast %cst_9 : f32 to vector<8x1xf32>
    %18 = arith.addf %14, %17 : vector<8x1xf32>
    %19 = math.rsqrt %18 : vector<8x1xf32>
    %20 = vector.broadcast %19 : vector<8x1xf32> to vector<8x32xf32>
    %21 = arith.mulf %16, %20 : vector<8x32xf32>
    %22 = vector.broadcast %2 : vector<1x32xf32> to vector<8x32xf32>
    %23 = arith.mulf %21, %22 : vector<8x32xf32>
    %24 = vector.broadcast %3 : vector<1x32xf32> to vector<8x32xf32>
    %25 = arith.addf %23, %24 : vector<8x32xf32>
    %26 = arith.truncf %25 : vector<8x32xf32> to vector<8x32xbf16>
    %c0_10 = arith.constant 0 : index
    %c0_11 = arith.constant 0 : index
    %27 = vector.load %arg5[%c0_10, %c0_11] : memref<32x96xbf16, #tpu.memory_space<vmem>>, vector<32x96xbf16>
    %cst_12 = arith.constant dense<0.000000e+00> : vector<8x96xf32>
    %28 = tpu.matmul %26, %27, %cst_12 {dimension_numbers = #tpu.dot_dimension_numbers<[1], [0], [0], [1], [0, 0, 1, 1], [], []>} : vector<8x32xbf16>, vector<32x96xbf16>, vector<8x96xf32> -> vector<8x96xf32>
    %c0_13 = arith.constant 0 : index
    %c0_14 = arith.constant 0 : index
    %29 = vector.load %arg6[%c0_13, %c0_14] : memref<1x96xf32, #tpu.memory_space<vmem>>, vector<1x96xf32>
    %30 = vector.broadcast %29 : vector<1x96xf32> to vector<8x96xf32>
    %31 = arith.addf %28, %30 : vector<8x96xf32>
    %32 = arith.truncf %31 : vector<8x96xf32> to vector<8x96xbf16>
    %c0_15 = arith.constant 0 : index
    %c0_16 = arith.constant 0 : index
    %c0_17 = arith.constant 0 : index
    %33 = vector.load %arg7[%c0_15, %c0_16, %c0_17] : memref<1x8x96xbf16, #tpu.memory_space<vmem>>, vector<1x8x96xbf16>
    %34 = vector.shape_cast %33 : vector<1x8x96xbf16> to vector<8x96xbf16>
    %35 = vector.shape_cast %32 : vector<8x96xbf16> to vector<1x8x96xbf16>
    tpu.vector_store %arg7[%c0_15, %c0_16, %c0_17], %35 {strides = array<i32>} : memref<1x8x96xbf16, #tpu.memory_space<vmem>>, vector<1x8x96xbf16>,
    return
  }
  func.func @transform_0(%arg0: i32, %arg1: i32) -> (i32, i32, i32) {
    %c0_i32 = arith.constant 0 : i32
    %c0_i32_0 = arith.constant 0 : i32
    return %arg0, %arg1, %c0_i32 : i32, i32, i32
  }
  func.func @transform_1(%arg0: i32, %arg1: i32) -> (i32, i32) {
    %c0_i32 = arith.constant 0 : i32
    %c0_i32_0 = arith.constant 0 : i32
    %c0_i32_1 = arith.constant 0 : i32
    return %c0_i32, %c0_i32_0 : i32, i32
  }
  func.func @transform_2(%arg0: i32, %arg1: i32) -> (i32, i32) {
    %c0_i32 = arith.constant 0 : i32
    %c0_i32_0 = arith.constant 0 : i32
    %c0_i32_1 = arith.constant 0 : i32
    return %c0_i32, %c0_i32_0 : i32, i32
  }
  func.func @transform_3(%arg0: i32, %arg1: i32) -> (i32, i32) {
    %c0_i32 = arith.constant 0 : i32
    %c0_i32_0 = arith.constant 0 : i32
    %c0_i32_1 = arith.constant 0 : i32
    return %c0_i32, %c0_i32_0 : i32, i32
  }
  func.func @transform_4(%arg0: i32, %arg1: i32) -> (i32, i32) {
    %c0_i32 = arith.constant 0 : i32
    %c0_i32_0 = arith.constant 0 : i32
    %c0_i32_1 = arith.constant 0 : i32
    return %c0_i32, %c0_i32_0 : i32, i32
  }
  func.func @transform_5(%arg0: i32, %arg1: i32) -> (i32, i32, i32) {
    %c0_i32 = arith.constant 0 : i32
    %c0_i32_0 = arith.constant 0 : i32
    return %arg0, %arg1, %c0_i32 : i32, i32, i32
  }
}

module attributes {stable_mosaic.version = 11 : i64} {
  func.func @ln_qkv_kernel(%arg0: i32, %arg1: i32, %arg2: memref<1x8x32xf32, #tpu.memory_space<vmem>>, %arg3: memref<1x32xf32, #tpu.memory_space<vmem>>, %arg4: memref<1x32xf32, #tpu.memory_space<vmem>>, %arg5: memref<32x96xbf16, #tpu.memory_space<vmem>>, %arg6: memref<1x96xf32, #tpu.memory_space<vmem>>, %arg7: memref<1x8x96xbf16, #tpu.memory_space<vmem>>) attributes {dimension_semantics = [#tpu.dimension_semantics<parallel>, #tpu.dimension_semantics<parallel>], iteration_bounds = array<i64: 2, 1>, scalar_prefetch = 0 : i64, scratch_operands = 0 : i64, tpu.core_type = #tpu.core_type<tc>, window_params = [{transform_indices = @transform_0, window_bounds = array<i64: 1, 8, 32>}, {pipeline_mode = #tpu.pipeline_mode<synchronous>, transform_indices = @transform_1, window_bounds = array<i64: 1, 32>}, {pipeline_mode = #tpu.pipeline_mode<synchronous>, transform_indices = @transform_2, window_bounds = array<i64: 1, 32>}, {pipeline_mode = #tpu.pipeline_mode<synchronous>, transform_indices = @transform_3, window_bounds = array<i64: 32, 96>}, {pipeline_mode = #tpu.pipeline_mode<synchronous>, transform_indices = @transform_4, window_bounds = array<i64: 1, 96>}, {transform_indices = @transform_5, window_bounds = array<i64: 1, 8, 96>}]} {
    %c0 = arith.constant 0 : index
    %c0_0 = arith.constant 0 : index
    %c0_1 = arith.constant 0 : index
    %0 = vector.load %arg2[%c0, %c0_0, %c0_1] : memref<1x8x32xf32, #tpu.memory_space<vmem>>, vector<1x8x32xf32>
    %1 = vector.shape_cast %0 : vector<1x8x32xf32> to vector<8x32xf32>
    %c0_2 = arith.constant 0 : index
    %c0_3 = arith.constant 0 : index
    %2 = vector.load %arg3[%c0_2, %c0_3] : memref<1x32xf32, #tpu.memory_space<vmem>>, vector<1x32xf32>
    %c0_4 = arith.constant 0 : index
    %c0_5 = arith.constant 0 : index
    %3 = vector.load %arg4[%c0_4, %c0_5] : memref<1x32xf32, #tpu.memory_space<vmem>>, vector<1x32xf32>
    %cst = arith.constant dense<0.000000e+00> : vector<8xf32>
    %4 = vector.multi_reduction <add>, %1, %cst [1] : vector<8x32xf32> to vector<8xf32>
    %5 = vector.shape_cast %4 : vector<8xf32> to vector<8x1xf32>
    %cst_6 = arith.constant 3.200000e+01 : f32
    %6 = vector.broadcast %cst_6 : f32 to vector<8x1xf32>
    %7 = arith.divf %5, %6 : vector<8x1xf32>
    %8 = vector.broadcast %7 : vector<8x1xf32> to vector<8x32xf32>
    %9 = arith.subf %1, %8 : vector<8x32xf32>
    %10 = arith.mulf %9, %9 : vector<8x32xf32>
    %cst_7 = arith.constant dense<0.000000e+00> : vector<8xf32>
    %11 = vector.multi_reduction <add>, %10, %cst_7 [1] : vector<8x32xf32> to vector<8xf32>
    %12 = vector.shape_cast %11 : vector<8xf32> to vector<8x1xf32>
    %cst_8 = arith.constant 3.200000e+01 : f32
    %13 = vector.broadcast %cst_8 : f32 to vector<8x1xf32>
    %14 = arith.divf %12, %13 : vector<8x1xf32>
    %15 = vector.broadcast %7 : vector<8x1xf32> to vector<8x32xf32>
    %16 = arith.subf %1, %15 : vector<8x32xf32>
    %cst_9 = arith.constant 9.99999974E-6 : f32
    %17 = vector.broadcast %cst_9 : f32 to vector<8x1xf32>
    %18 = arith.addf %14, %17 : vector<8x1xf32>
    %19 = math.rsqrt %18 : vector<8x1xf32>
    %20 = vector.broadcast %19 : vector<8x1xf32> to vector<8x32xf32>
    %21 = arith.mulf %16, %20 : vector<8x32xf32>
    %22 = vector.broadcast %2 : vector<1x32xf32> to vector<8x32xf32>
    %23 = arith.mulf %21, %22 : vector<8x32xf32>
    %24 = vector.broadcast %3 : vector<1x32xf32> to vector<8x32xf32>
    %25 = arith.addf %23, %24 : vector<8x32xf32>
    %26 = arith.truncf %25 : vector<8x32xf32> to vector<8x32xbf16>
    %c0_10 = arith.constant 0 : index
    %c0_11 = arith.constant 0 : index
    %27 = vector.load %arg5[%c0_10, %c0_11] : memref<32x96xbf16, #tpu.memory_space<vmem>>, vector<32x96xbf16>
    %cst_12 = arith.constant dense<0.000000e+00> : vector<8x96xf32>
    %28 = tpu.matmul %26, %27, %cst_12 {dimension_numbers = #tpu.dot_dimension_numbers<[1], [0], [0], [1], [0, 0, 1, 1], [], []>} : vector<8x32xbf16>, vector<32x96xbf16>, vector<8x96xf32> -> vector<8x96xf32>
    %c0_13 = arith.constant 0 : index
    %c0_14 = arith.constant 0 : index
    %29 = vector.load %arg6[%c0_13, %c0_14] : memref<1x96xf32, #tpu.memory_space<vmem>>, vector<1x96xf32>
    %30 = vector.broadcast %29 : vector<1x96xf32> to vector<8x96xf32>
    %31 = arith.addf %28, %30 : vector<8x96xf32>
    %32 = arith.truncf %31 : vector<8x96xf32> to vector<8x96xbf16>
    %c0_15 = arith.constant 0 : index
    %c0_16 = arith.constant 0 : index
    %c0_17 = arith.constant 0 : index
    %33 = vector.load %arg7[%c0_15, %c0_16, %c0_17] : memref<1x8x96xbf16, #tpu.memory_space<vmem>>, vector<1x8x96xbf16>
    %34 = vector.shape_cast %33 : vector<1x8x96xbf16> to vector<8x96xbf16>
    %35 = vector.shape_cast %32 : vector<8x96xbf16> to vector<1x8x96xbf16>
    tpu.vector_store %arg7[%c0_15, %c0_16, %c0_17], %35 {strides = array<i32>} : memref<1x8x96xbf16, #tpu.memory_space<vmem>>, vector<1x8x96xbf16>,
    return
  }
  func.func @transform_0(%arg0: i32, %arg1: i32) -> (i32, i32, i32) {
    %c0_i32 = arith.constant 0 : i32
    %c0_i32_0 = arith.constant 0 : i32
    return %arg0, %arg1, %c0_i32 : i32, i32, i32
  }
  func.func @transform_1(%arg0: i32, %arg1: i32) -> (i32, i32) {
    %c0_i32 = arith.constant 0 : i32
    %c0_i32_0 = arith.constant 0 : i32
    %c0_i32_1 = arith.constant 0 : i32
    return %c0_i32, %c0_i32_0 : i32, i32
  }
  func.func @transform_2(%arg0: i32, %arg1: i32) -> (i32, i32) {
    %c0_i32 = arith.constant 0 : i32
    %c0_i32_0 = arith.constant 0 : i32
    %c0_i32_1 = arith.constant 0 : i32
    return %c0_i32, %c0_i32_0 : i32, i32
  }
  func.func @transform_3(%arg0: i32, %arg1: i32) -> (i32, i32) {
    %c0_i32 = arith.constant 0 : i32
    %c0_i32_0 = arith.constant 0 : i32
    %c0_i32_1 = arith.constant 0 : i32
    return %c0_i32, %c0_i32_0 : i32, i32
  }
  func.func @transform_4(%arg0: i32, %arg1: i32) -> (i32, i32) {
    %c0_i32 = arith.constant 0 : i32
    %c0_i32_0 = arith.constant 0 : i32
    %c0_i32_1 = arith.constant 0 : i32
    return %c0_i32, %c0_i32_0 : i32, i32
  }
  func.func @transform_5(%arg0: i32, %arg1: i32) -> (i32, i32, i32) {
    %c0_i32 = arith.constant 0 : i32
    %c0_i32_0 = arith.constant 0 : i32
    return %arg0, %arg1, %c0_i32 : i32, i32, i32
  }
}

</mosaic_0001>

<llo_original>
// kernel: tpu_custom_call.1
$region0: #{tpu_custom_call.1}
  #allocation0 [shape = 'u32[]', space=smem, size = 0x4, offset = 0x4, fixed_abs, tag = 'smem constant byte address 0x4 - core index']
  #allocation1 [shape = 'u32[144,128]{1,0:T(1,128)}', space=vmem, size = 0x12000, scoped, tag = 'internal scratch']
  %s0 = inlined_call_operand.hbm [shape: f32[2,8,32], index: 0, kind: input, shape index: {}]
  %s1 = inlined_call_operand.vmem [shape: f32[1,32], index: 1, kind: input, shape index: {}]
  %s2 = inlined_call_operand.vmem [shape: f32[1,32], index: 2, kind: input, shape index: {}]
  %s3 = inlined_call_operand.hbm [shape: bf16[32,96], index: 3, kind: input, shape index: {}]
  %s4 = inlined_call_operand.vmem [shape: f32[1,96], index: 4, kind: input, shape index: {}]
  %s5 = inlined_call_operand.hbm [shape: bf16[2,8,96], index: 5, kind: output, shape index: {}]
  %s6 = sld [smem:[#allocation0]]
  $region61: #{tpu_custom_call.1} parent=0
    _
  %s8 = ssub.s32 1, %s6
  %s9 = scalar_select 0, %s8, %s6
  $region1: #{tpu_custom_call.1} parent=0
    #allocation2 [shape = 'u8[8192]{0}', space=vmem, size = 0x2000, scoped, tag = 'input window, operand 0']
    #allocation3 [shape = 's32[2]{0}', space=sflag, size = 0x8, scoped, tag = 'scoped memory for tpu_custom_call.1']
    #allocation4 [shape = 's32[2]{0}', space=sflag, size = 0x8, scoped, tag = 'scoped memory for tpu_custom_call.1']
    #allocation5 [shape = 'u8[8192]{0}', space=vmem, size = 0x2000, scoped, tag = 'input window, operand 3, single buffered']
    #allocation6 [shape = 's32[1]{0}', space=sflag, size = 0x4, scoped, tag = 'scoped memory for tpu_custom_call.1']
    #allocation7 [shape = 'u8[4096]{0}', space=vmem, size = 0x1000, scoped, tag = 'output window, operand 0']
    %10 = vsyncpa [#allocation3], 0
    %s11 = scalar_lea.sflag [#allocation3], 1
    %12 = vsyncpa %s11, 0
    %13 = vsyncpa [#allocation6], 0
    %14 = vsyncpa [#allocation4], 0
    %s15 = scalar_lea.sflag [#allocation4], 1
    %16 = vsyncpa %s15, 0
    loop: start=0, step=1, limit=4
    $region2: #{tpu_custom_call.1} parent=1 // loop_pre_header
      _
    $region3: #{tpu_custom_call.1} parent=1 // loop_header
      %s18 = sphi 0, %s22
      %p19 = scmp.ge.s32.totalorder %s18, 4
      %s25 = sphi 0, %s37
      %s26 = sphi 0, %s33
      %s27 = sphi 0, %s25
      %s28 = sphi 0, %s26
      %s29 = sphi 0, %s27
      %s30 = sphi 0, %s28
      %s42 = sphi 0, %s44
      %s45 = sphi 0, %s42
      %s46 = sphi 0, %s45
      %s62 = sphi 0, %s46
      %s66 = sphi 0, %s66
      %s68 = sphi 0, %s66
      %s69 = sphi 0, %s68
      %s83 = sphi 0, %s69
      %s87 = sphi 0, %s87
      %s89 = sphi 0, %s87
      %s90 = sphi 0, %s89
      %s104 = sphi 0, %s90
      %s108 = sphi 0, %s108
      %s110 = sphi 0, %s108
      %s111 = sphi 0, %s110
      %s125 = sphi 0, %s111
      %s129 = sphi 0, %s129
      %s131 = sphi 0, %s129
      %s132 = sphi 0, %s131
      %s146 = sphi 0, %s132
      %s154 = sphi 0, %s156
      %s157 = sphi 0, %s154
      %s158 = sphi 0, %s157
      %s174 = sphi 0, %s158
    $region4: #{tpu_custom_call.1} parent=1 // loop_header_branch
      %21 = sbr.rel (%p19) target = $region8
    $region5: #{tpu_custom_call.1} parent=1 // loop_body
      %s23 = ssub.s32 %s18, 1
      %s24 = ssub.s32 %s18, 2
      %s31 = sadd.s32 1, %s26
      %p32 = scmp.ge.s32.totalorder %s31, 1
      %s33 = scalar_select %p32, 0, %s31
      %s34 = sadd.s32 1, %s25
      %s35 = scalar_select %p32, %s34, %s25
      %p36 = scmp.ge.s32.totalorder %s35, 2
      %s37 = scalar_select %p36, 0, %s35
      %s38 = ssub.s32 %s25, %s37
      %s39 = ssub.s32 %s26, %s33
      %s40 = sor.u32 %s38, %s39
      %p41 = scmp.eq.s32.totalorder %s40, 0
      %s43 = sadd.s32 %s42, 1
      %s44 = scalar_select %p41, %s42, %s43
      %p47 = pneg %p41
      %p48 = scmp.eq.s32.totalorder %s18, 1
      %p49 = por %p47, %p48
      %p50 = scmp.ne.s32.totalorder %s42, %s45
      %p51 = scmp.eq.s32.totalorder %s18, 0
      %p52 = por %p50, %p51
      %p53 = scmp.ne.s32.totalorder %s42, %s45
      %p54 = scmp.eq.s32.totalorder %s23, 1
      %p55 = por %p53, %p54
      %p56 = scmp.ne.s32.totalorder %s45, %s46
      %p57 = scmp.eq.s32.totalorder %s23, 0
      %p58 = por %p56, %p57
      %p59 = scmp.ne.s32.totalorder %s45, %s46
      %p60 = scmp.eq.s32.totalorder %s24, 1
      %p61 = por %p59, %p60
      %p63 = scmp.ne.s32.totalorder %s46, %s62
      %p64 = scmp.eq.s32.totalorder %s24, 0
      %p65 = por %p63, %p64
      %s67 = sadd.s32 %s66, 1
      %p70 = scmp.eq.s32.totalorder %s18, 1
      %p71 = scmp.ne.s32.totalorder %s66, %s68
      %p72 = scmp.eq.s32.totalorder %s18, 0
      %p73 = por %p71, %p72
      %p74 = scmp.ne.s32.totalorder %s66, %s68
      %p75 = scmp.eq.s32.totalorder %s23, 1
      %p76 = por %p74, %p75
      %p77 = scmp.ne.s32.totalorder %s68, %s69
      %p78 = scmp.eq.s32.totalorder %s23, 0
      %p79 = por %p77, %p78
      %p80 = scmp.ne.s32.totalorder %s68, %s69
      %p81 = scmp.eq.s32.totalorder %s24, 1
      %p82 = por %p80, %p81
      %p84 = scmp.ne.s32.totalorder %s69, %s83
      %p85 = scmp.eq.s32.totalorder %s24, 0
      %p86 = por %p84, %p85
      %s88 = sadd.s32 %s87, 1
      %p91 = scmp.eq.s32.totalorder %s18, 1
      %p92 = scmp.ne.s32.totalorder %s87, %s89
      %p93 = scmp.eq.s32.totalorder %s18, 0
      %p94 = por %p92, %p93
      %p95 = scmp.ne.s32.totalorder %s87, %s89
      %p96 = scmp.eq.s32.totalorder %s23, 1
      %p97 = por %p95, %p96
      %p98 = scmp.ne.s32.totalorder %s89, %s90
      %p99 = scmp.eq.s32.totalorder %s23, 0
      %p100 = por %p98, %p99
      %p101 = scmp.ne.s32.totalorder %s89, %s90
      %p102 = scmp.eq.s32.totalorder %s24, 1
      %p103 = por %p101, %p102
      %p105 = scmp.ne.s32.totalorder %s90, %s104
      %p106 = scmp.eq.s32.totalorder %s24, 0
      %p107 = por %p105, %p106
      %s109 = sadd.s32 %s108, 1
      %p112 = scmp.eq.s32.totalorder %s18, 1
      %p113 = scmp.ne.s32.totalorder %s108, %s110
      %p114 = scmp.eq.s32.totalorder %s18, 0
      %p115 = por %p113, %p114
      %p116 = scmp.ne.s32.totalorder %s108, %s110
      %p117 = scmp.eq.s32.totalorder %s23, 1
      %p118 = por %p116, %p117
      %p119 = scmp.ne.s32.totalorder %s110, %s111
      %p120 = scmp.eq.s32.totalorder %s23, 0
      %p121 = por %p119, %p120
      %p122 = scmp.ne.s32.totalorder %s110, %s111
      %p123 = scmp.eq.s32.totalorder %s24, 1
      %p124 = por %p122, %p123
      %p126 = scmp.ne.s32.totalorder %s111, %s125
      %p127 = scmp.eq.s32.totalorder %s24, 0
      %p128 = por %p126, %p127
      %s130 = sadd.s32 %s129, 1
      %p133 = scmp.eq.s32.totalorder %s18, 1
      %p134 = scmp.ne.s32.totalorder %s129, %s131
      %p135 = scmp.eq.s32.totalorder %s18, 0
      %p136 = por %p134, %p135
      %p137 = scmp.ne.s32.totalorder %s129, %s131
      %p138 = scmp.eq.s32.totalorder %s23, 1
      %p139 = por %p137, %p138
      %p140 = scmp.ne.s32.totalorder %s131, %s132
      %p141 = scmp.eq.s32.totalorder %s23, 0
      %p142 = por %p140, %p141
      %p143 = scmp.ne.s32.totalorder %s131, %s132
      %p144 = scmp.eq.s32.totalorder %s24, 1
      %p145 = por %p143, %p144
      %p147 = scmp.ne.s32.totalorder %s132, %s146
      %p148 = scmp.eq.s32.totalorder %s24, 0
      %p149 = por %p147, %p148
      %s150 = ssub.s32 %s25, %s37
      %s151 = ssub.s32 %s26, %s33
      %s152 = sor.u32 %s150, %s151
      %p153 = scmp.eq.s32.totalorder %s152, 0
      %s155 = sadd.s32 %s154, 1
      %s156 = scalar_select %p153, %s154, %s155
      %p159 = pneg %p153
      %p160 = scmp.eq.s32.totalorder %s18, 1
      %p161 = por %p159, %p160
      %p162 = scmp.ne.s32.totalorder %s154, %s157
      %p163 = scmp.eq.s32.totalorder %s18, 0
      %p164 = por %p162, %p163
      %p165 = scmp.ne.s32.totalorder %s154, %s157
      %p166 = scmp.eq.s32.totalorder %s23, 1
      %p167 = por %p165, %p166
      %p168 = scmp.ne.s32.totalorder %s157, %s158
      %p169 = scmp.eq.s32.totalorder %s23, 0
      %p170 = por %p168, %p169
      %p171 = scmp.ne.s32.totalorder %s157, %s158
      %p172 = scmp.eq.s32.totalorder %s24, 1
      %p173 = por %p171, %p172
      %p175 = scmp.ne.s32.totalorder %s158, %s174
      %p176 = scmp.eq.s32.totalorder %s24, 0
      %p177 = por %p175, %p176
      %p178 = scmp.le.s32.totalorder 1, %s18
      %p179 = scmp.lt.s32.totalorder %s18, 3
      %p180 = pnand %p178, %p179
      %p181 = pneg %p180
      // Predicated region
      $region9: #{tpu_custom_call.1} parent=5 // pred_check
        _
      $region10: #{tpu_custom_call.1} parent=5 // pred_check_branch
        %183 = sbr.rel (%p180) target = $region12
      $region11: #{tpu_custom_call.1} parent=5 // pred_region
        %s184 = ssub.s32 %s18, 1
        // Predicated region
        $region13: #{tpu_custom_call.1} parent=11 // pred_check
          %p185 = pneg %p79
        $region14: #{tpu_custom_call.1} parent=11 // pred_check_branch
          %187 = sbr.rel (%p185) target = $region16
        $region15: #{tpu_custom_call.1} parent=11 // pred_region
          _
        $region16: #{tpu_custom_call.1} parent=11 // pred_fallthru
          _
        // Predicated region
        $region17: #{tpu_custom_call.1} parent=11 // pred_check
          %p188 = pneg %p100
        $region18: #{tpu_custom_call.1} parent=11 // pred_check_branch
          %190 = sbr.rel (%p188) target = $region20
        $region19: #{tpu_custom_call.1} parent=11 // pred_region
          _
        $region20: #{tpu_custom_call.1} parent=11 // pred_fallthru
          _
        // Predicated region
        $region21: #{tpu_custom_call.1} parent=11 // pred_check
          %p191 = pneg %p121
        $region22: #{tpu_custom_call.1} parent=11 // pred_check_branch
          %193 = sbr.rel (%p191) target = $region24
        $region23: #{tpu_custom_call.1} parent=11 // pred_region
          %s195 = ssub.s32 256, 256
          %196 = vsyncadd [#allocation6], %s195
          %s197 = sshll.u32 [#allocation5], 4
          %s198 = int_to_ptr.vmem [resolvable:$true] %s197
          %203 = dma.hbm_to_vmem [thread:$0]  %s3, 256, %s198, [#allocation6], 64, 64, 4
        $region24: #{tpu_custom_call.1} parent=11 // pred_fallthru
          _
        // Predicated region
        $region25: #{tpu_custom_call.1} parent=11 // pred_check
          %p204 = pneg %p142
        $region26: #{tpu_custom_call.1} parent=11 // pred_check_branch
          %206 = sbr.rel (%p204) target = $region28
        $region27: #{tpu_custom_call.1} parent=11 // pred_region
          _
        $region28: #{tpu_custom_call.1} parent=11 // pred_fallthru
          _
      $region12: #{tpu_custom_call.1} parent=5 // pred_fallthru
        _
      %p207 = scmp.lt.s32.totalorder %s18, 2
      // Predicated region
      $region29: #{tpu_custom_call.1} parent=5 // pred_check
        %p208 = pneg %p207
      $region30: #{tpu_custom_call.1} parent=5 // pred_check_branch
        %210 = sbr.rel (%p208) target = $region32
      $region31: #{tpu_custom_call.1} parent=5 // pred_region
        // Predicated region
        $region33: #{tpu_custom_call.1} parent=31 // pred_check
          %p211 = pneg %p52
        $region34: #{tpu_custom_call.1} parent=31 // pred_check_branch
          %213 = sbr.rel (%p211) target = $region36
        $region35: #{tpu_custom_call.1} parent=31 // pred_region
          %s214 = sand.u32 %s42, 1
          %s215 = scalar_lea.sflag [#allocation3], %s214
          %s216 = sand.u32 %s42, 1
          %s217 = smul.addr %s216, 8
          %s218 = scalar_lea.vmem [#allocation2], %s217
          %s220 = ssub.s32 128, 128
          %221 = vsyncadd %s215, %s220
          %s222 = sadd.s32 %s26, %s25
          %s223 = smul.addr %s222, 128
          %s224 = scalar_lea.hbm %s0, %s223
          %s226 = sshll.u32 %s218, 4
          %s227 = int_to_ptr.vmem [resolvable:$true] %s226
          %229 = dma.hbm_to_vmem [thread:$0]  %s224, 128, %s227, %s215
        $region36: #{tpu_custom_call.1} parent=31 // pred_fallthru
          _
      $region32: #{tpu_custom_call.1} parent=5 // pred_fallthru
        _
      %p230 = scmp.le.s32.totalorder 1, %s18
      %p231 = scmp.lt.s32.totalorder %s18, 3
      %p232 = pnand %p230, %p231
      %p233 = pneg %p232
      // Predicated region
      $region37: #{tpu_custom_call.1} parent=5 // pred_check
        _
      $region38: #{tpu_custom_call.1} parent=5 // pred_check_branch
        %235 = sbr.rel (%p232) target = $region40
      $region39: #{tpu_custom_call.1} parent=5 // pred_region
        %s236 = ssub.s32 %s18, 1
        %s237 = sand.u32 %s45, 1
        %s238 = scalar_lea.sflag [#allocation3], %s237
        %s239 = sand.u32 %s45, 1
        %s240 = smul.addr %s239, 8
        %s241 = scalar_lea.vmem [#allocation2], %s240
        // Predicated region
        $region41: #{tpu_custom_call.1} parent=39 // pred_check
          %p242 = pneg %p58
        $region42: #{tpu_custom_call.1} parent=39 // pred_check_branch
          %244 = sbr.rel (%p242) target = $region44
        $region43: #{tpu_custom_call.1} parent=39 // pred_region
          %245 = dma.done %s238, 128
        $region44: #{tpu_custom_call.1} parent=39 // pred_fallthru
          _
        // Predicated region
        $region45: #{tpu_custom_call.1} parent=39 // pred_check
          %p246 = pneg %p121
        $region46: #{tpu_custom_call.1} parent=39 // pred_check_branch
          %248 = sbr.rel (%p246) target = $region48
        $region47: #{tpu_custom_call.1} parent=39 // pred_region
          %249 = dma.done [#allocation6], 256
        $region48: #{tpu_custom_call.1} parent=39 // pred_fallthru
          _
        %s250 = sand.u32 %s45, 1
        %s251 = scalar_lea.sflag [#allocation3], %s250
        %s252 = sand.u32 %s45, 1
        %s253 = smul.addr %s252, 8
        %s254 = scalar_lea.vmem [#allocation2], %s253
        %p255 = pneg %p58
        %p256 = pneg %p55
        %p257 = pneg %p79
        %p258 = pneg %p76
        %p259 = pneg %p100
        %p260 = pneg %p97
        %p261 = pneg %p121
        %p262 = pneg %p118
        %p263 = pneg %p142
        %p264 = pneg %p139
        %p265 = pneg %p170
        %p266 = pneg %p167
        %s267 = sand.u32 %s157, 1
        %s268 = scalar_lea.sflag [#allocation4], %s267
        %s269 = sand.u32 %s157, 1
        %s270 = smul.addr %s269, 4
        %s271 = scalar_lea.vmem [#allocation7], %s270
        %v273 = vld [vmem:[%s241] sm:$0xff]
        %v274 = vld [vmem:[%s1] sm:$0x1]
        %v275 = vld [vmem:[%s2] sm:$0x1]
        %vm276 = vcmask 261120
        %v277 = vsel %vm276, %v273, 0.0
        %278 = vadd.xlane.f32.xlu0 %v277
        %v279 = vpop.xlane.xlu0 %278
        %v280 = vrcp.pop 32.0
        %v281 = vmul.f32 %v279, %v280
        %v282 = vsub.f32 %v273, %v281
        %v283 = vmul.f32 %v282, %v282
        %v284 = vsel %vm276, %v283, 0.0
        %285 = vadd.xlane.f32.xlu0 %v284
        %v286 = vpop.xlane.xlu0 %285
        %v287 = vmul.f32 %v286, %v280
        %v288 = vadd.f32 %v287, 1e-05
        %v289 = vrsqrt.pop %v288
        %v290 = vmul.f32 %v282, %v289
        %v292 = vlaneseq
        %v293 = vshrl.u32 %v292, 7
        %v294 = vsub.s32 0, %v293
        %v295 = vrot.slane %v274, %v294
        %v297 = vmul.f32 %v290, %v295
        %v299 = vlaneseq
        %v300 = vshrl.u32 %v299, 7
        %v301 = vsub.s32 0, %v300
        %v302 = vrot.slane %v275, %v301
        %v304 = vadd.f32 %v297, %v302
        %v305 = vpack.c.bf16 %v304, %v304
        %v306 = vld [vmem:[#allocation5] sm:$0xf]
        %v307 = vld [vmem:[#allocation5 + $0x4] sm:$0xf]
        %v308 = vld [vmem:[#allocation5 + $0x8] sm:$0xf]
        %v309 = vld [vmem:[#allocation5 + $0xc] sm:$0xf]
        %v310 = vld [vmem:[%s4] sm:$0x1]
        %v312 = vlaneseq
        %v313 = vshrl.u32 %v312, 7
        %v314 = vsub.s32 0, %v313
        %v315 = vrot.slane %v310, %v314
        %v321 = vunpack.c.l.b16 %v306
        %v322 = vunpack.c.l.b16 %v307
        %v323 = vunpack.c.l.b16 %v308
        %v324 = vunpack.c.l.b16 %v309
        %v325 = vpack.c.b16 %v322, %v321
        %v326 = vpack.c.b16 %v324, %v323
        %v330 = vsel %vm276, %v305, 0
        %332 = vmatprep.subr.bf16.mxu0 0
        %333 = vmatpush1.bf16.msra.mxu0 0
        %334 = vmatprep.subr.bf16.mxu0 0
        %335 = vmatpush1.bf16.msra.mxu0 0
        %336 = vmatprep.subr.bf16.mxu0 0
        %337 = vmatpush1.bf16.msra.mxu0 0
        %338 = vmatprep.subr.bf16.mxu0 0
        %339 = vmatpush1.bf16.msra.mxu0 0
        %340 = vmatprep.subr.bf16.mxu0 0
        %341 = vmatpush1.bf16.msra.mxu0 0
        %342 = vmatprep.subr.bf16.mxu0 0
        %343 = vmatpush1.bf16.msra.mxu0 0
        %344 = vmatprep.subr.bf16.mxu0 0
        %345 = vmatpush1.bf16.msra.mxu0 %v326
        %346 = vmatprep.subr.bf16.mxu0 0
        %347 = vmatpush1.bf16.msra.mxu0 %v325
        %348 = vmatprep.subr.bf16.mxu0 0
        %349 = vmatpush2.bf16.msra.mxu0 0
        %350 = vmatprep.subr.bf16.mxu0 0
        %351 = vmatpush2.bf16.msra.mxu0 0
        %352 = vmatprep.subr.bf16.mxu0 0
        %353 = vmatpush2.bf16.msra.mxu0 0
        %354 = vmatprep.subr.bf16.mxu0 0
        %355 = vmatpush2.bf16.msra.mxu0 0
        %356 = vmatprep.subr.bf16.mxu0 0
        %357 = vmatpush2.bf16.msra.mxu0 0
        %358 = vmatprep.subr.bf16.mxu0 0
        %359 = vmatpush2.bf16.msra.mxu0 0
        %360 = vmatprep.subr.bf16.mxu0 0
        %361 = vmatpush2.bf16.msra.mxu0 0
        %362 = vmatprep.subr.bf16.mxu0 0
        %363 = vmatpush2.bf16.msra.mxu0 0
        %364 = vmatprep.mubr.bf16.mxu0 0
        %365 = vmatmul.mubr.bf16.gmra.mxu0 %v330
        %v366 = vpop.f32.mrf.mxu0
        %v367 = vadd.f32 %v315, %v366
        %v368 = vpop.f32.mrf.mxu0
        %v369 = vpop.f32.mrf.mxu0
        %v370 = vpop.f32.mrf.mxu0
        %371 = vdwg.mxu0
        %v372 = vpack.c.bf16 %v367, %v367
        %vm373 = vcmask 781312
        %374 = vst.msk [vmem:[%s271] sm:$0xf] %vm373, %v372
        %s375 = sand.u32 %s157, 1
        %s376 = scalar_lea.sflag [#allocation4], %s375
        %s377 = sand.u32 %s157, 1
        %s378 = smul.addr %s377, 4
        %s379 = scalar_lea.vmem [#allocation7], %s378
        // Predicated region
        $region49: #{tpu_custom_call.1} parent=39 // pred_check
          %p380 = pneg %p167
        $region50: #{tpu_custom_call.1} parent=39 // pred_check_branch
          %382 = sbr.rel (%p380) target = $region52
        $region51: #{tpu_custom_call.1} parent=39 // pred_region
          %s384 = ssub.s32 64, 64
          %385 = vsyncadd %s376, %s384
          %s386 = sadd.s32 %s28, %s27
          %s387 = smul.addr %s386, 64
          %s388 = scalar_lea.hbm %s5, %s387
          %s390 = sshll.u32 %s379, 4
          %s391 = int_to_ptr.vmem [resolvable:$true] %s390
          %393 = dma.vmem_to_hbm [thread:$0]  %s391, 64, %s388, %s376
        $region52: #{tpu_custom_call.1} parent=39 // pred_fallthru
          _
      $region40: #{tpu_custom_call.1} parent=5 // pred_fallthru
        _
      %p394 = scmp.le.s32.totalorder 2, %s18
      // Predicated region
      $region53: #{tpu_custom_call.1} parent=5 // pred_check
        %p395 = pneg %p394
      $region54: #{tpu_custom_call.1} parent=5 // pred_check_branch
        %397 = sbr.rel (%p395) target = $region56
      $region55: #{tpu_custom_call.1} parent=5 // pred_region
        %s398 = ssub.s32 %s18, 2
        // Predicated region
        $region57: #{tpu_custom_call.1} parent=55 // pred_check
          %p399 = pneg %p173
        $region58: #{tpu_custom_call.1} parent=55 // pred_check_branch
          %401 = sbr.rel (%p399) target = $region60
        $region59: #{tpu_custom_call.1} parent=55 // pred_region
          %s402 = sand.u32 %s158, 1
          %s403 = scalar_lea.sflag [#allocation4], %s402
          %s404 = sand.u32 %s158, 1
          %s405 = smul.addr %s404, 4
          %s406 = scalar_lea.vmem [#allocation7], %s405
          %407 = dma.done %s403, 64
        $region60: #{tpu_custom_call.1} parent=55 // pred_fallthru
          _
      $region56: #{tpu_custom_call.1} parent=5 // pred_fallthru
        _
    $region6: #{tpu_custom_call.1} parent=1 // loop_footer
      %s22 = sadd.s32 1, %s18
    $region7: #{tpu_custom_call.1} parent=1 // loop_footer_branch
      %17 = sbr.rel target = $region3
    $region8: #{tpu_custom_call.1} parent=1 // loop_exit
      _
    %408 = vsyncpa [#allocation3], 1
    %s409 = scalar_lea.sflag [#allocation3], 1
    %410 = vsyncpa %s409, 1
    %411 = vsyncpa [#allocation6], 1
    %412 = vsyncpa [#allocation4], 1
    %s413 = scalar_lea.sflag [#allocation4], 1
    %414 = vsyncpa %s413, 1

// kernel: tpu_custom_call.1
$region0: #{tpu_custom_call.1}
  #allocation0 [shape = 'u32[]', space=smem, size = 0x4, offset = 0x4, fixed_abs, tag = 'smem constant byte address 0x4 - core index']
  #allocation1 [shape = 'u32[144,128]{1,0:T(1,128)}', space=vmem, size = 0x12000, scoped, tag = 'internal scratch']
  %s0 = inlined_call_operand.hbm [shape: f32[2,8,32], index: 0, kind: input, shape index: {}]
  %s1 = inlined_call_operand.vmem [shape: f32[1,32], index: 1, kind: input, shape index: {}]
  %s2 = inlined_call_operand.vmem [shape: f32[1,32], index: 2, kind: input, shape index: {}]
  %s3 = inlined_call_operand.hbm [shape: bf16[32,96], index: 3, kind: input, shape index: {}]
  %s4 = inlined_call_operand.vmem [shape: f32[1,96], index: 4, kind: input, shape index: {}]
  %s5 = inlined_call_operand.hbm [shape: bf16[2,8,96], index: 5, kind: output, shape index: {}]
  %s6 = sld [smem:[#allocation0]]
  $region61: #{tpu_custom_call.1} parent=0
    _
  %s8 = ssub.s32 1, %s6
  %s9 = scalar_select 0, %s8, %s6
  $region1: #{tpu_custom_call.1} parent=0
    #allocation2 [shape = 'u8[8192]{0}', space=vmem, size = 0x2000, scoped, tag = 'input window, operand 0']
    #allocation3 [shape = 's32[2]{0}', space=sflag, size = 0x8, scoped, tag = 'scoped memory for tpu_custom_call.1']
    #allocation4 [shape = 's32[2]{0}', space=sflag, size = 0x8, scoped, tag = 'scoped memory for tpu_custom_call.1']
    #allocation5 [shape = 'u8[8192]{0}', space=vmem, size = 0x2000, scoped, tag = 'input window, operand 3, single buffered']
    #allocation6 [shape = 's32[1]{0}', space=sflag, size = 0x4, scoped, tag = 'scoped memory for tpu_custom_call.1']
    #allocation7 [shape = 'u8[4096]{0}', space=vmem, size = 0x1000, scoped, tag = 'output window, operand 0']
    %10 = vsyncpa [#allocation3], 0
    %s11 = scalar_lea.sflag [#allocation3], 1
    %12 = vsyncpa %s11, 0
    %13 = vsyncpa [#allocation6], 0
    %14 = vsyncpa [#allocation4], 0
    %s15 = scalar_lea.sflag [#allocation4], 1
    %16 = vsyncpa %s15, 0
    loop: start=0, step=1, limit=4
    $region2: #{tpu_custom_call.1} parent=1 // loop_pre_header
      _
    $region3: #{tpu_custom_call.1} parent=1 // loop_header
      %s18 = sphi 0, %s22
      %p19 = scmp.ge.s32.totalorder %s18, 4
      %s25 = sphi 0, %s37
      %s26 = sphi 0, %s33
      %s27 = sphi 0, %s25
      %s28 = sphi 0, %s26
      %s29 = sphi 0, %s27
      %s30 = sphi 0, %s28
      %s42 = sphi 0, %s44
      %s45 = sphi 0, %s42
      %s46 = sphi 0, %s45
      %s62 = sphi 0, %s46
      %s66 = sphi 0, %s66
      %s68 = sphi 0, %s66
      %s69 = sphi 0, %s68
      %s83 = sphi 0, %s69
      %s87 = sphi 0, %s87
      %s89 = sphi 0, %s87
      %s90 = sphi 0, %s89
      %s104 = sphi 0, %s90
      %s108 = sphi 0, %s108
      %s110 = sphi 0, %s108
      %s111 = sphi 0, %s110
      %s125 = sphi 0, %s111
      %s129 = sphi 0, %s129
      %s131 = sphi 0, %s129
      %s132 = sphi 0, %s131
      %s146 = sphi 0, %s132
      %s154 = sphi 0, %s156
      %s157 = sphi 0, %s154
      %s158 = sphi 0, %s157
      %s174 = sphi 0, %s158
    $region4: #{tpu_custom_call.1} parent=1 // loop_header_branch
      %21 = sbr.rel (%p19) target = $region8
    $region5: #{tpu_custom_call.1} parent=1 // loop_body
      %s23 = ssub.s32 %s18, 1
      %s24 = ssub.s32 %s18, 2
      %s31 = sadd.s32 1, %s26
      %p32 = scmp.ge.s32.totalorder %s31, 1
      %s33 = scalar_select %p32, 0, %s31
      %s34 = sadd.s32 1, %s25
      %s35 = scalar_select %p32, %s34, %s25
      %p36 = scmp.ge.s32.totalorder %s35, 2
      %s37 = scalar_select %p36, 0, %s35
      %s38 = ssub.s32 %s25, %s37
      %s39 = ssub.s32 %s26, %s33
      %s40 = sor.u32 %s38, %s39
      %p41 = scmp.eq.s32.totalorder %s40, 0
      %s43 = sadd.s32 %s42, 1
      %s44 = scalar_select %p41, %s42, %s43
      %p47 = pneg %p41
      %p48 = scmp.eq.s32.totalorder %s18, 1
      %p49 = por %p47, %p48
      %p50 = scmp.ne.s32.totalorder %s42, %s45
      %p51 = scmp.eq.s32.totalorder %s18, 0
      %p52 = por %p50, %p51
      %p53 = scmp.ne.s32.totalorder %s42, %s45
      %p54 = scmp.eq.s32.totalorder %s23, 1
      %p55 = por %p53, %p54
      %p56 = scmp.ne.s32.totalorder %s45, %s46
      %p57 = scmp.eq.s32.totalorder %s23, 0
      %p58 = por %p56, %p57
      %p59 = scmp.ne.s32.totalorder %s45, %s46
      %p60 = scmp.eq.s32.totalorder %s24, 1
      %p61 = por %p59, %p60
      %p63 = scmp.ne.s32.totalorder %s46, %s62
      %p64 = scmp.eq.s32.totalorder %s24, 0
      %p65 = por %p63, %p64
      %s67 = sadd.s32 %s66, 1
      %p70 = scmp.eq.s32.totalorder %s18, 1
      %p71 = scmp.ne.s32.totalorder %s66, %s68
      %p72 = scmp.eq.s32.totalorder %s18, 0
      %p73 = por %p71, %p72
      %p74 = scmp.ne.s32.totalorder %s66, %s68
      %p75 = scmp.eq.s32.totalorder %s23, 1
      %p76 = por %p74, %p75
      %p77 = scmp.ne.s32.totalorder %s68, %s69
      %p78 = scmp.eq.s32.totalorder %s23, 0
      %p79 = por %p77, %p78
      %p80 = scmp.ne.s32.totalorder %s68, %s69
      %p81 = scmp.eq.s32.totalorder %s24, 1
      %p82 = por %p80, %p81
      %p84 = scmp.ne.s32.totalorder %s69, %s83
      %p85 = scmp.eq.s32.totalorder %s24, 0
      %p86 = por %p84, %p85
      %s88 = sadd.s32 %s87, 1
      %p91 = scmp.eq.s32.totalorder %s18, 1
      %p92 = scmp.ne.s32.totalorder %s87, %s89
      %p93 = scmp.eq.s32.totalorder %s18, 0
      %p94 = por %p92, %p93
      %p95 = scmp.ne.s32.totalorder %s87, %s89
      %p96 = scmp.eq.s32.totalorder %s23, 1
      %p97 = por %p95, %p96
      %p98 = scmp.ne.s32.totalorder %s89, %s90
      %p99 = scmp.eq.s32.totalorder %s23, 0
      %p100 = por %p98, %p99
      %p101 = scmp.ne.s32.totalorder %s89, %s90
      %p102 = scmp.eq.s32.totalorder %s24, 1
      %p103 = por %p101, %p102
      %p105 = scmp.ne.s32.totalorder %s90, %s104
      %p106 = scmp.eq.s32.totalorder %s24, 0
      %p107 = por %p105, %p106
      %s109 = sadd.s32 %s108, 1
      %p112 = scmp.eq.s32.totalorder %s18, 1
      %p113 = scmp.ne.s32.totalorder %s108, %s110
      %p114 = scmp.eq.s32.totalorder %s18, 0
      %p115 = por %p113, %p114
      %p116 = scmp.ne.s32.totalorder %s108, %s110
      %p117 = scmp.eq.s32.totalorder %s23, 1
      %p118 = por %p116, %p117
      %p119 = scmp.ne.s32.totalorder %s110, %s111
      %p120 = scmp.eq.s32.totalorder %s23, 0
      %p121 = por %p119, %p120
      %p122 = scmp.ne.s32.totalorder %s110, %s111
      %p123 = scmp.eq.s32.totalorder %s24, 1
      %p124 = por %p122, %p123
      %p126 = scmp.ne.s32.totalorder %s111, %s125
      %p127 = scmp.eq.s32.totalorder %s24, 0
      %p128 = por %p126, %p127
      %s130 = sadd.s32 %s129, 1
      %p133 = scmp.eq.s32.totalorder %s18, 1
      %p134 = scmp.ne.s32.totalorder %s129, %s131
      %p135 = scmp.eq.s32.totalorder %s18, 0
      %p136 = por %p134, %p135
      %p137 = scmp.ne.s32.totalorder %s129, %s131
      %p138 = scmp.eq.s32.totalorder %s23, 1
      %p139 = por %p137, %p138
      %p140 = scmp.ne.s32.totalorder %s131, %s132
      %p141 = scmp.eq.s32.totalorder %s23, 0
      %p142 = por %p140, %p141
      %p143 = scmp.ne.s32.totalorder %s131, %s132
      %p144 = scmp.eq.s32.totalorder %s24, 1
      %p145 = por %p143, %p144
      %p147 = scmp.ne.s32.totalorder %s132, %s146
      %p148 = scmp.eq.s32.totalorder %s24, 0
      %p149 = por %p147, %p148
      %s150 = ssub.s32 %s25, %s37
      %s151 = ssub.s32 %s26, %s33
      %s152 = sor.u32 %s150, %s151
      %p153 = scmp.eq.s32.totalorder %s152, 0
      %s155 = sadd.s32 %s154, 1
      %s156 = scalar_select %p153, %s154, %s155
      %p159 = pneg %p153
      %p160 = scmp.eq.s32.totalorder %s18, 1
      %p161 = por %p159, %p160
      %p162 = scmp.ne.s32.totalorder %s154, %s157
      %p163 = scmp.eq.s32.totalorder %s18, 0
      %p164 = por %p162, %p163
      %p165 = scmp.ne.s32.totalorder %s154, %s157
      %p166 = scmp.eq.s32.totalorder %s23, 1
      %p167 = por %p165, %p166
      %p168 = scmp.ne.s32.totalorder %s157, %s158
      %p169 = scmp.eq.s32.totalorder %s23, 0
      %p170 = por %p168, %p169
      %p171 = scmp.ne.s32.totalorder %s157, %s158
      %p172 = scmp.eq.s32.totalorder %s24, 1
      %p173 = por %p171, %p172
      %p175 = scmp.ne.s32.totalorder %s158, %s174
      %p176 = scmp.eq.s32.totalorder %s24, 0
      %p177 = por %p175, %p176
      %p178 = scmp.le.s32.totalorder 1, %s18
      %p179 = scmp.lt.s32.totalorder %s18, 3
      %p180 = pnand %p178, %p179
      %p181 = pneg %p180
      // Predicated region
      $region9: #{tpu_custom_call.1} parent=5 // pred_check
        _
      $region10: #{tpu_custom_call.1} parent=5 // pred_check_branch
        %183 = sbr.rel (%p180) target = $region12
      $region11: #{tpu_custom_call.1} parent=5 // pred_region
        %s184 = ssub.s32 %s18, 1
        // Predicated region
        $region13: #{tpu_custom_call.1} parent=11 // pred_check
          %p185 = pneg %p79
        $region14: #{tpu_custom_call.1} parent=11 // pred_check_branch
          %187 = sbr.rel (%p185) target = $region16
        $region15: #{tpu_custom_call.1} parent=11 // pred_region
          _
        $region16: #{tpu_custom_call.1} parent=11 // pred_fallthru
          _
        // Predicated region
        $region17: #{tpu_custom_call.1} parent=11 // pred_check
          %p188 = pneg %p100
        $region18: #{tpu_custom_call.1} parent=11 // pred_check_branch
          %190 = sbr.rel (%p188) target = $region20
        $region19: #{tpu_custom_call.1} parent=11 // pred_region
          _
        $region20: #{tpu_custom_call.1} parent=11 // pred_fallthru
          _
        // Predicated region
        $region21: #{tpu_custom_call.1} parent=11 // pred_check
          %p191 = pneg %p121
        $region22: #{tpu_custom_call.1} parent=11 // pred_check_branch
          %193 = sbr.rel (%p191) target = $region24
        $region23: #{tpu_custom_call.1} parent=11 // pred_region
          %s195 = ssub.s32 256, 256
          %196 = vsyncadd [#allocation6], %s195
          %s197 = sshll.u32 [#allocation5], 4
          %s198 = int_to_ptr.vmem [resolvable:$true] %s197
          %203 = dma.hbm_to_vmem [thread:$0]  %s3, 256, %s198, [#allocation6], 64, 64, 4
        $region24: #{tpu_custom_call.1} parent=11 // pred_fallthru
          _
        // Predicated region
        $region25: #{tpu_custom_call.1} parent=11 // pred_check
          %p204 = pneg %p142
        $region26: #{tpu_custom_call.1} parent=11 // pred_check_branch
          %206 = sbr.rel (%p204) target = $region28
        $region27: #{tpu_custom_call.1} parent=11 // pred_region
          _
        $region28: #{tpu_custom_call.1} parent=11 // pred_fallthru
          _
      $region12: #{tpu_custom_call.1} parent=5 // pred_fallthru
        _
      %p207 = scmp.lt.s32.totalorder %s18, 2
      // Predicated region
      $region29: #{tpu_custom_call.1} parent=5 // pred_check
        %p208 = pneg %p207
      $region30: #{tpu_custom_call.1} parent=5 // pred_check_branch
        %210 = sbr.rel (%p208) target = $region32
      $region31: #{tpu_custom_call.1} parent=5 // pred_region
        // Predicated region
        $region33: #{tpu_custom_call.1} parent=31 // pred_check
          %p211 = pneg %p52
        $region34: #{tpu_custom_call.1} parent=31 // pred_check_branch
          %213 = sbr.rel (%p211) target = $region36
        $region35: #{tpu_custom_call.1} parent=31 // pred_region
          %s214 = sand.u32 %s42, 1
          %s215 = scalar_lea.sflag [#allocation3], %s214
          %s216 = sand.u32 %s42, 1
          %s217 = smul.addr %s216, 8
          %s218 = scalar_lea.vmem [#allocation2], %s217
          %s220 = ssub.s32 128, 128
          %221 = vsyncadd %s215, %s220
          %s222 = sadd.s32 %s26, %s25
          %s223 = smul.addr %s222, 128
          %s224 = scalar_lea.hbm %s0, %s223
          %s226 = sshll.u32 %s218, 4
          %s227 = int_to_ptr.vmem [resolvable:$true] %s226
          %229 = dma.hbm_to_vmem [thread:$0]  %s224, 128, %s227, %s215
        $region36: #{tpu_custom_call.1} parent=31 // pred_fallthru
          _
      $region32: #{tpu_custom_call.1} parent=5 // pred_fallthru
        _
      %p230 = scmp.le.s32.totalorder 1, %s18
      %p231 = scmp.lt.s32.totalorder %s18, 3
      %p232 = pnand %p230, %p231
      %p233 = pneg %p232
      // Predicated region
      $region37: #{tpu_custom_call.1} parent=5 // pred_check
        _
      $region38: #{tpu_custom_call.1} parent=5 // pred_check_branch
        %235 = sbr.rel (%p232) target = $region40
      $region39: #{tpu_custom_call.1} parent=5 // pred_region
        %s236 = ssub.s32 %s18, 1
        %s237 = sand.u32 %s45, 1
        %s238 = scalar_lea.sflag [#allocation3], %s237
        %s239 = sand.u32 %s45, 1
        %s240 = smul.addr %s239, 8
        %s241 = scalar_lea.vmem [#allocation2], %s240
        // Predicated region
        $region41: #{tpu_custom_call.1} parent=39 // pred_check
          %p242 = pneg %p58
        $region42: #{tpu_custom_call.1} parent=39 // pred_check_branch
          %244 = sbr.rel (%p242) target = $region44
        $region43: #{tpu_custom_call.1} parent=39 // pred_region
          %245 = dma.done %s238, 128
        $region44: #{tpu_custom_call.1} parent=39 // pred_fallthru
          _
        // Predicated region
        $region45: #{tpu_custom_call.1} parent=39 // pred_check
          %p246 = pneg %p121
        $region46: #{tpu_custom_call.1} parent=39 // pred_check_branch
          %248 = sbr.rel (%p246) target = $region48
        $region47: #{tpu_custom_call.1} parent=39 // pred_region
          %249 = dma.done [#allocation6], 256
        $region48: #{tpu_custom_call.1} parent=39 // pred_fallthru
          _
        %s250 = sand.u32 %s45, 1
        %s251 = scalar_lea.sflag [#allocation3], %s250
        %s252 = sand.u32 %s45, 1
        %s253 = smul.addr %s252, 8
        %s254 = scalar_lea.vmem [#allocation2], %s253
        %p255 = pneg %p58
        %p256 = pneg %p55
        %p257 = pneg %p79
        %p258 = pneg %p76
        %p259 = pneg %p100
        %p260 = pneg %p97
        %p261 = pneg %p121
        %p262 = pneg %p118
        %p263 = pneg %p142
        %p264 = pneg %p139
        %p265 = pneg %p170
        %p266 = pneg %p167
        %s267 = sand.u32 %s157, 1
        %s268 = scalar_lea.sflag [#allocation4], %s267
        %s269 = sand.u32 %s157, 1
        %s270 = smul.addr %s269, 4
        %s271 = scalar_lea.vmem [#allocation7], %s270
        %v273 = vld [vmem:[%s241] sm:$0xff]
        %v274 = vld [vmem:[%s1] sm:$0x1]
        %v275 = vld [vmem:[%s2] sm:$0x1]
        %vm276 = vcmask 261120
        %v277 = vsel %vm276, %v273, 0.0
        %278 = vadd.xlane.f32.xlu0 %v277
        %v279 = vpop.xlane.xlu0 %278
        %v280 = vrcp.pop 32.0
        %v281 = vmul.f32 %v279, %v280
        %v282 = vsub.f32 %v273, %v281
        %v283 = vmul.f32 %v282, %v282
        %v284 = vsel %vm276, %v283, 0.0
        %285 = vadd.xlane.f32.xlu0 %v284
        %v286 = vpop.xlane.xlu0 %285
        %v287 = vmul.f32 %v286, %v280
        %v288 = vadd.f32 %v287, 1e-05
        %v289 = vrsqrt.pop %v288
        %v290 = vmul.f32 %v282, %v289
        %v292 = vlaneseq
        %v293 = vshrl.u32 %v292, 7
        %v294 = vsub.s32 0, %v293
        %v295 = vrot.slane %v274, %v294
        %v297 = vmul.f32 %v290, %v295
        %v299 = vlaneseq
        %v300 = vshrl.u32 %v299, 7
        %v301 = vsub.s32 0, %v300
        %v302 = vrot.slane %v275, %v301
        %v304 = vadd.f32 %v297, %v302
        %v305 = vpack.c.bf16 %v304, %v304
        %v306 = vld [vmem:[#allocation5] sm:$0xf]
        %v307 = vld [vmem:[#allocation5 + $0x4] sm:$0xf]
        %v308 = vld [vmem:[#allocation5 + $0x8] sm:$0xf]
        %v309 = vld [vmem:[#allocation5 + $0xc] sm:$0xf]
        %v310 = vld [vmem:[%s4] sm:$0x1]
        %v312 = vlaneseq
        %v313 = vshrl.u32 %v312, 7
        %v314 = vsub.s32 0, %v313
        %v315 = vrot.slane %v310, %v314
        %v321 = vunpack.c.l.b16 %v306
        %v322 = vunpack.c.l.b16 %v307
        %v323 = vunpack.c.l.b16 %v308
        %v324 = vunpack.c.l.b16 %v309
        %v325 = vpack.c.b16 %v322, %v321
        %v326 = vpack.c.b16 %v324, %v323
        %v330 = vsel %vm276, %v305, 0
        %332 = vmatprep.subr.bf16.mxu0 0
        %333 = vmatpush1.bf16.msra.mxu0 0
        %334 = vmatprep.subr.bf16.mxu0 0
        %335 = vmatpush1.bf16.msra.mxu0 0
        %336 = vmatprep.subr.bf16.mxu0 0
        %337 = vmatpush1.bf16.msra.mxu0 0
        %338 = vmatprep.subr.bf16.mxu0 0
        %339 = vmatpush1.bf16.msra.mxu0 0
        %340 = vmatprep.subr.bf16.mxu0 0
        %341 = vmatpush1.bf16.msra.mxu0 0
        %342 = vmatprep.subr.bf16.mxu0 0
        %343 = vmatpush1.bf16.msra.mxu0 0
        %344 = vmatprep.subr.bf16.mxu0 0
        %345 = vmatpush1.bf16.msra.mxu0 %v326
        %346 = vmatprep.subr.bf16.mxu0 0
        %347 = vmatpush1.bf16.msra.mxu0 %v325
        %348 = vmatprep.subr.bf16.mxu0 0
        %349 = vmatpush2.bf16.msra.mxu0 0
        %350 = vmatprep.subr.bf16.mxu0 0
        %351 = vmatpush2.bf16.msra.mxu0 0
        %352 = vmatprep.subr.bf16.mxu0 0
        %353 = vmatpush2.bf16.msra.mxu0 0
        %354 = vmatprep.subr.bf16.mxu0 0
        %355 = vmatpush2.bf16.msra.mxu0 0
        %356 = vmatprep.subr.bf16.mxu0 0
        %357 = vmatpush2.bf16.msra.mxu0 0
        %358 = vmatprep.subr.bf16.mxu0 0
        %359 = vmatpush2.bf16.msra.mxu0 0
        %360 = vmatprep.subr.bf16.mxu0 0
        %361 = vmatpush2.bf16.msra.mxu0 0
        %362 = vmatprep.subr.bf16.mxu0 0
        %363 = vmatpush2.bf16.msra.mxu0 0
        %364 = vmatprep.mubr.bf16.mxu0 0
        %365 = vmatmul.mubr.bf16.gmra.mxu0 %v330
        %v366 = vpop.f32.mrf.mxu0
        %v367 = vadd.f32 %v315, %v366
        %v368 = vpop.f32.mrf.mxu0
        %v369 = vpop.f32.mrf.mxu0
        %v370 = vpop.f32.mrf.mxu0
        %371 = vdwg.mxu0
        %v372 = vpack.c.bf16 %v367, %v367
        %vm373 = vcmask 781312
        %374 = vst.msk [vmem:[%s271] sm:$0xf] %vm373, %v372
        %s375 = sand.u32 %s157, 1
        %s376 = scalar_lea.sflag [#allocation4], %s375
        %s377 = sand.u32 %s157, 1
        %s378 = smul.addr %s377, 4
        %s379 = scalar_lea.vmem [#allocation7], %s378
        // Predicated region
        $region49: #{tpu_custom_call.1} parent=39 // pred_check
          %p380 = pneg %p167
        $region50: #{tpu_custom_call.1} parent=39 // pred_check_branch
          %382 = sbr.rel (%p380) target = $region52
        $region51: #{tpu_custom_call.1} parent=39 // pred_region
          %s384 = ssub.s32 64, 64
          %385 = vsyncadd %s376, %s384
          %s386 = sadd.s32 %s28, %s27
          %s387 = smul.addr %s386, 64
          %s388 = scalar_lea.hbm %s5, %s387
          %s390 = sshll.u32 %s379, 4
          %s391 = int_to_ptr.vmem [resolvable:$true] %s390
          %393 = dma.vmem_to_hbm [thread:$0]  %s391, 64, %s388, %s376
        $region52: #{tpu_custom_call.1} parent=39 // pred_fallthru
          _
      $region40: #{tpu_custom_call.1} parent=5 // pred_fallthru
        _
      %p394 = scmp.le.s32.totalorder 2, %s18
      // Predicated region
      $region53: #{tpu_custom_call.1} parent=5 // pred_check
        %p395 = pneg %p394
      $region54: #{tpu_custom_call.1} parent=5 // pred_check_branch
        %397 = sbr.rel (%p395) target = $region56
      $region55: #{tpu_custom_call.1} parent=5 // pred_region
        %s398 = ssub.s32 %s18, 2
        // Predicated region
        $region57: #{tpu_custom_call.1} parent=55 // pred_check
          %p399 = pneg %p173
        $region58: #{tpu_custom_call.1} parent=55 // pred_check_branch
          %401 = sbr.rel (%p399) target = $region60
        $region59: #{tpu_custom_call.1} parent=55 // pred_region
          %s402 = sand.u32 %s158, 1
          %s403 = scalar_lea.sflag [#allocation4], %s402
          %s404 = sand.u32 %s158, 1
          %s405 = smul.addr %s404, 4
          %s406 = scalar_lea.vmem [#allocation7], %s405
          %407 = dma.done %s403, 64
        $region60: #{tpu_custom_call.1} parent=55 // pred_fallthru
          _
      $region56: #{tpu_custom_call.1} parent=5 // pred_fallthru
        _
    $region6: #{tpu_custom_call.1} parent=1 // loop_footer
      %s22 = sadd.s32 1, %s18
    $region7: #{tpu_custom_call.1} parent=1 // loop_footer_branch
      %17 = sbr.rel target = $region3
    $region8: #{tpu_custom_call.1} parent=1 // loop_exit
      _
    %408 = vsyncpa [#allocation3], 1
    %s409 = scalar_lea.sflag [#allocation3], 1
    %410 = vsyncpa %s409, 1
    %411 = vsyncpa [#allocation6], 1
    %412 = vsyncpa [#allocation4], 1
    %s413 = scalar_lea.sflag [#allocation4], 1
    %414 = vsyncpa %s413, 1

</llo_original>
